<compile_context>
chip_gen: v7x
topology: tpu7x:2x2x1
jax: 0.10.0
libtpu: 0.0.40
codegen_flags: <defaults>
</compile_context>

<pallas_src>
import functools

import jax
import jax.numpy as jnp
from jax.experimental import pallas as pl
from jax.experimental.pallas import tpu as pltpu


def _conv_relu_kernel(x_ref, b_ref, o_ref, lhs_ref, *, kh_size, stride, padding,
                      h_out):
    """One image per grid step.

    x_ref:   (Cin, H, W)             NCHW image (batch axis squeezed by BlockSpec)
    b_ref:   (KH*Cin*W, W_out*Cout)  banded weight (width padding / stride folded in)
    o_ref:   (H_out, W_out*Cout)     lane-dense output block
    lhs_ref: (H_out, KH*Cin*W)       im2col scratch (f32)
    """
    c_in, h_in, w = x_ref.shape

    # --- im2col fill: KH*Cin static ref-slice copies, no padded-input scratch. ---
    for kh in range(kh_size):
        # Static valid output-row range for this tap (handles height zero-padding).
        ho_start = 0 if kh >= padding else -(-(padding - kh) // stride)
        ho_end = max(ho_start, min(h_out, (h_in - 1 + padding - kh) // stride + 1))
        col0 = kh * c_in * w
        ncol = c_in * w
        # Zero only the halo rows of this tap's column group (at most 2*padding rows).
        if ho_start > 0:
            lhs_ref[0:ho_start, col0:col0 + ncol] = jnp.zeros(
                (ho_start, ncol), lhs_ref.dtype)
        if ho_end < h_out:
            lhs_ref[ho_end:h_out, col0:col0 + ncol] = jnp.zeros(
                (h_out - ho_end, ncol), lhs_ref.dtype)
        rows = ho_end - ho_start
        if rows > 0:
            row0 = ho_start * stride + kh - padding          # >= 0, static
            row_sl = (pl.ds(row0, rows) if stride == 1
                      else pl.ds(row0, rows, stride))        # strided ref slice
            for ci in range(c_in):
                lhs_ref[ho_start:ho_end, col0 + ci * w:col0 + (ci + 1) * w] = (
                    x_ref[ci, row_sl, :].astype(lhs_ref.dtype))

    # --- single fused matmul, f32 accumulation.  One whole-LHS cast (bf16 path). ---
    acc = jnp.dot(lhs_ref[...].astype(b_ref.dtype), b_ref[...],
                  preferred_element_type=jnp.float32)
    # ReLU in f32 (v5e has no bf16 VPU); one lane-dense store.
    o_ref[...] = jnp.maximum(acc, 0.0).astype(o_ref.dtype)


@functools.partial(jax.jit, static_argnames=("stride", "padding", "kh", "c_out"))
def _conv_relu_forward(x_nchw, bmat, *, stride, padding, kh, c_out):
    n, c_in, h_in, w_in = x_nchw.shape
    k_dim, n_cols = bmat.shape
    assert k_dim == kh * c_in * w_in
    h_out = (h_in + 2 * padding - kh) // stride + 1
    w_out = n_cols // c_out

    kernel = functools.partial(_conv_relu_kernel, kh_size=kh, stride=stride,
                               padding=padding, h_out=h_out)

    # Explicit VMEM budget (double-buffered in/out blocks + resident weight + scratch)
    # with generous headroom; keeps us honest on v7x's 64 MiB VMEM.
    x_bytes = jnp.dtype(x_nchw.dtype).itemsize
    b_bytes = jnp.dtype(bmat.dtype).itemsize
    est = (2 * c_in * h_in * w_in * x_bytes      # input block, double-buffered
           + 2 * k_dim * n_cols * b_bytes        # banded weight
           + 2 * h_out * n_cols * x_bytes        # output block
           + h_out * k_dim * 4)                  # im2col scratch (f32)
    vmem_limit = int(min(64 << 20, max(8 << 20, 4 * est)))

    out_flat = pl.pallas_call(
        kernel,
        out_shape=jax.ShapeDtypeStruct((n, h_out, n_cols), x_nchw.dtype),
        grid_spec=pltpu.PrefetchScalarGridSpec(
            num_scalar_prefetch=0,
            grid=(n,),                                       # one image per step
            in_specs=[
                pl.BlockSpec((None, c_in, h_in, w_in), lambda i: (i, 0, 0, 0)),
                pl.BlockSpec((k_dim, n_cols), lambda i: (0, 0)),  # resident, no re-DMA
            ],
            out_specs=pl.BlockSpec((None, h_out, n_cols), lambda i: (i, 0, 0)),
            scratch_shapes=[pltpu.VMEM((h_out, k_dim), jnp.float32)],
        ),
        compiler_params=pltpu.CompilerParams(
            dimension_semantics=("parallel",),               # megacore on v7x
            vmem_limit_bytes=vmem_limit),
    )(x_nchw, bmat)

    # (N, H_out, W_out*C_out) -> (N, H_out, W_out, C_out) is a free metadata split;
    # one small transpose back to NCHW to match the PyTorch output layout.
    out = out_flat.reshape(n, h_out, w_out, c_out)
    return jnp.transpose(out, (0, 3, 1, 2))


def _build_banded_weight(weight_oihw, w_in, stride, padding, dtype):
    """B[kh*Cin*W + ci*W + iw, ow*Cout + co] = W[co, ci, kh, iw + pad - ow*stride] (0 if OOB).

    Folds width zero-padding, the W-stride and the (kw, ci) -> (w_out, c_out) mapping
    into the weight, so the kernel never pads / transposes activations along W.  The
    (kh, ci, iw) row order puts the K=128 split on a tap boundary (2*Cin*W = 128 here),
    which keeps v5e's 4x128^2 MXU passes clean.  Built once per (weight, width).
    """
    c_out, c_in, kh, kw = weight_oihw.shape
    w_out = (w_in + 2 * padding - kw) // stride + 1
    wt = jnp.transpose(weight_oihw, (2, 3, 1, 0))        # (KH, KW, Cin, Cout)
    iw = jnp.arange(w_in)[:, None]                       # input column
    ow = jnp.arange(w_out)[None, :]                      # output column
    kw_idx = iw + padding - ow * stride                  # (W, W_out)
    valid = (kw_idx >= 0) & (kw_idx < kw)
    kw_safe = jnp.clip(kw_idx, 0, kw - 1)
    b = wt[:, kw_safe]                                   # (KH, W, W_out, Cin, Cout)
    b = jnp.where(valid[None, :, :, None, None], b, 0.0)
    b = jnp.transpose(b, (0, 3, 1, 2, 4))                # (KH, Cin, W, W_out, Cout)
    return b.reshape(kh * c_in * w_in, w_out * c_out).astype(dtype)


def make_conv_relu(weight_oihw, *, stride=1, padding=0, mxu_bf16=False):
    """Returns forward(x_nchw) equivalent to ConvModule: Conv2d(bias=False) -> ReLU.

    The banded weight is precomputed once per (weight, input width), outside the
    per-call jit path.  mxu_bf16=True feeds bf16 operands to the MXU (recommended on
    v6e/v7x, f32 accumulation); kept off by default so the default path matches an
    f32 XLA conv to tight tolerance.
    """
    c_out, c_in, kh, kw = (int(s) for s in weight_oihw.shape)
    op_dtype = jnp.bfloat16 if mxu_bf16 else jnp.float32
    bmat_cache = {}

    def forward(x_nchw):
        n, ci, h_in, w_in = x_nchw.shape
        assert ci == c_in, "channel mismatch"
        w_in = int(w_in)
        if w_in not in bmat_cache:
            # NOTE: lane-dense output stores need W_out*Cout % 128 == 0 (128 exactly
            # here); other shapes stay correct but fall back to masked stores.
            bmat_cache[w_in] = _build_banded_weight(
                weight_oihw, w_in, stride, padding, op_dtype)
        return _conv_relu_forward(x_nchw, bmat_cache[w_in], stride=stride,
                                  padding=padding, kh=kh, c_out=c_out)

    return forward


if __name__ == "__main__":
    # ConvModule(in_channels=4, out_channels=8, kernel_size=3, stride=1, padding=1)
    in_channels, out_channels, kernel_size, stride, padding = 4, 8, 3, 1, 1

    key = jax.random.PRNGKey(0)
    kx, kw_ = jax.random.split(key)

    # input: N=2, C=4, H=W=16 (NCHW, as PyTorch expects)
    x = jax.random.normal(kx, (2, in_channels, 16, 16), dtype=jnp.float32)

    # deterministic Conv2d weight (Cout, Cin, KH, KW), kaiming-ish scale
    fan_in = in_channels * kernel_size * kernel_size
    weight = jax.random.normal(
        kw_, (out_channels, in_channels, kernel_size, kernel_size),
        dtype=jnp.float32) * (2.0 / fan_in) ** 0.5

    fwd = make_conv_relu(weight, stride=stride, padding=padding)
    out = jax.block_until_ready(fwd(x))

    # reference: XLA conv + relu
    ref = jax.lax.conv_general_dilated(
        x, weight, window_strides=(stride, stride),
        padding=[(padding, padding), (padding, padding)],
        dimension_numbers=("NCHW", "OIHW", "NCHW"))
    ref = jnp.maximum(ref, 0.0)

    assert out.shape == (2, out_channels, 16, 16)
    assert jnp.allclose(out, ref, atol=1e-5, rtol=1e-5)

    # bf16-MXU fast path (recommended on v6e/v7x): f32 accumulation, looser tolerance.
    fwd_bf16 = make_conv_relu(weight, stride=stride, padding=padding, mxu_bf16=True)
    out_bf16 = jax.block_until_ready(fwd_bf16(x))
    assert jnp.allclose(out_bf16, ref, atol=3e-2, rtol=3e-2)

    print("KERNEL_OK")
</pallas_src>

<mosaic_0001>
module attributes {stable_mosaic.version = 11 : i64} {
  func.func @_conv_relu_kernel(%arg0: i32, %arg1: memref<1x4x16x16xf32, #tpu.memory_space<vmem>>, %arg2: memref<192x128xf32, #tpu.memory_space<vmem>>, %arg3: memref<1x16x128xf32, #tpu.memory_space<vmem>>, %arg4: memref<16x192xf32, #tpu.memory_space<vmem>>) attributes {dimension_semantics = [#tpu.dimension_semantics<parallel>], iteration_bounds = array<i64: 2>, scalar_prefetch = 0 : i64, scratch_operands = 1 : i64, tpu.core_type = #tpu.core_type<tc>, window_params = [{transform_indices = @transform_0, window_bounds = array<i64: 1, 4, 16, 16>}, {pipeline_mode = #tpu.pipeline_mode<synchronous>, transform_indices = @transform_1, window_bounds = array<i64: 192, 128>}, {transform_indices = @transform_2, window_bounds = array<i64: 1, 16, 128>}]} {
    %cst = arith.constant 0.000000e+00 : f32
    %0 = vector.broadcast %cst : f32 to vector<1x64xf32>
    %c0 = arith.constant 0 : index
    %c0_0 = arith.constant 0 : index
    %1 = vector.load %arg4[%c0, %c0_0] : memref<16x192xf32, #tpu.memory_space<vmem>>, vector<1x64xf32>
    tpu.vector_store %arg4[%c0, %c0_0], %0 {strides = array<i32>} : memref<16x192xf32, #tpu.memory_space<vmem>>, vector<1x64xf32>,
    %c0_1 = arith.constant 0 : index
    %c0_2 = arith.constant 0 : index
    %c0_3 = arith.constant 0 : index
    %c0_4 = arith.constant 0 : index
    %2 = vector.load %arg1[%c0_1, %c0_2, %c0_3, %c0_4] : memref<1x4x16x16xf32, #tpu.memory_space<vmem>>, vector<1x1x15x16xf32>
    %3 = vector.shape_cast %2 : vector<1x1x15x16xf32> to vector<15x16xf32>
    %c1 = arith.constant 1 : index
    %c0_5 = arith.constant 0 : index
    %4 = vector.load %arg4[%c1, %c0_5] : memref<16x192xf32, #tpu.memory_space<vmem>>, vector<15x16xf32>
    tpu.vector_store %arg4[%c1, %c0_5], %3 {strides = array<i32>} : memref<16x192xf32, #tpu.memory_space<vmem>>, vector<15x16xf32>,
    %c0_6 = arith.constant 0 : index
    %c1_7 = arith.constant 1 : index
    %c0_8 = arith.constant 0 : index
    %c0_9 = arith.constant 0 : index
    %5 = vector.load %arg1[%c0_6, %c1_7, %c0_8, %c0_9] : memref<1x4x16x16xf32, #tpu.memory_space<vmem>>, vector<1x1x15x16xf32>
    %6 = vector.shape_cast %5 : vector<1x1x15x16xf32> to vector<15x16xf32>
    %c1_10 = arith.constant 1 : index
    %c16 = arith.constant 16 : index
    %7 = vector.load %arg4[%c1_10, %c16] : memref<16x192xf32, #tpu.memory_space<vmem>>, vector<15x16xf32>
    tpu.vector_store %arg4[%c1_10, %c16], %6 {strides = array<i32>} : memref<16x192xf32, #tpu.memory_space<vmem>>, vector<15x16xf32>,
    %c0_11 = arith.constant 0 : index
    %c2 = arith.constant 2 : index
    %c0_12 = arith.constant 0 : index
    %c0_13 = arith.constant 0 : index
    %8 = vector.load %arg1[%c0_11, %c2, %c0_12, %c0_13] : memref<1x4x16x16xf32, #tpu.memory_space<vmem>>, vector<1x1x15x16xf32>
    %9 = vector.shape_cast %8 : vector<1x1x15x16xf32> to vector<15x16xf32>
    %c1_14 = arith.constant 1 : index
    %c32 = arith.constant 32 : index
    %10 = vector.load %arg4[%c1_14, %c32] : memref<16x192xf32, #tpu.memory_space<vmem>>, vector<15x16xf32>
    tpu.vector_store %arg4[%c1_14, %c32], %9 {strides = array<i32>} : memref<16x192xf32, #tpu.memory_space<vmem>>, vector<15x16xf32>,
    %c0_15 = arith.constant 0 : index
    %c3 = arith.constant 3 : index
    %c0_16 = arith.constant 0 : index
    %c0_17 = arith.constant 0 : index
    %11 = vector.load %arg1[%c0_15, %c3, %c0_16, %c0_17] : memref<1x4x16x16xf32, #tpu.memory_space<vmem>>, vector<1x1x15x16xf32>
    %12 = vector.shape_cast %11 : vector<1x1x15x16xf32> to vector<15x16xf32>
    %c1_18 = arith.constant 1 : index
    %c48 = arith.constant 48 : index
    %13 = vector.load %arg4[%c1_18, %c48] : memref<16x192xf32, #tpu.memory_space<vmem>>, vector<15x16xf32>
    tpu.vector_store %arg4[%c1_18, %c48], %12 {strides = array<i32>} : memref<16x192xf32, #tpu.memory_space<vmem>>, vector<15x16xf32>,
    %c0_19 = arith.constant 0 : index
    %c0_20 = arith.constant 0 : index
    %c0_21 = arith.constant 0 : index
    %c0_22 = arith.constant 0 : index
    %14 = vector.load %arg1[%c0_19, %c0_20, %c0_21, %c0_22] : memref<1x4x16x16xf32, #tpu.memory_space<vmem>>, vector<1x1x16x16xf32>
    %15 = vector.shape_cast %14 : vector<1x1x16x16xf32> to vector<16x16xf32>
    %c0_23 = arith.constant 0 : index
    %c64 = arith.constant 64 : index
    %16 = vector.load %arg4[%c0_23, %c64] : memref<16x192xf32, #tpu.memory_space<vmem>>, vector<16x16xf32>
    tpu.vector_store %arg4[%c0_23, %c64], %15 {strides = array<i32>} : memref<16x192xf32, #tpu.memory_space<vmem>>, vector<16x16xf32>,
    %c0_24 = arith.constant 0 : index
    %c1_25 = arith.constant 1 : index
    %c0_26 = arith.constant 0 : index
    %c0_27 = arith.constant 0 : index
    %17 = vector.load %arg1[%c0_24, %c1_25, %c0_26, %c0_27] : memref<1x4x16x16xf32, #tpu.memory_space<vmem>>, vector<1x1x16x16xf32>
    %18 = vector.shape_cast %17 : vector<1x1x16x16xf32> to vector<16x16xf32>
    %c0_28 = arith.constant 0 : index
    %c80 = arith.constant 80 : index
    %19 = vector.load %arg4[%c0_28, %c80] : memref<16x192xf32, #tpu.memory_space<vmem>>, vector<16x16xf32>
    tpu.vector_store %arg4[%c0_28, %c80], %18 {strides = array<i32>} : memref<16x192xf32, #tpu.memory_space<vmem>>, vector<16x16xf32>,
    %c0_29 = arith.constant 0 : index
    %c2_30 = arith.constant 2 : index
    %c0_31 = arith.constant 0 : index
    %c0_32 = arith.constant 0 : index
    %20 = vector.load %arg1[%c0_29, %c2_30, %c0_31, %c0_32] : memref<1x4x16x16xf32, #tpu.memory_space<vmem>>, vector<1x1x16x16xf32>
    %21 = vector.shape_cast %20 : vector<1x1x16x16xf32> to vector<16x16xf32>
    %c0_33 = arith.constant 0 : index
    %c96 = arith.constant 96 : index
    %22 = vector.load %arg4[%c0_33, %c96] : memref<16x192xf32, #tpu.memory_space<vmem>>, vector<16x16xf32>
    tpu.vector_store %arg4[%c0_33, %c96], %21 {strides = array<i32>} : memref<16x192xf32, #tpu.memory_space<vmem>>, vector<16x16xf32>,
    %c0_34 = arith.constant 0 : index
    %c3_35 = arith.constant 3 : index
    %c0_36 = arith.constant 0 : index
    %c0_37 = arith.constant 0 : index
    %23 = vector.load %arg1[%c0_34, %c3_35, %c0_36, %c0_37] : memref<1x4x16x16xf32, #tpu.memory_space<vmem>>, vector<1x1x16x16xf32>
    %24 = vector.shape_cast %23 : vector<1x1x16x16xf32> to vector<16x16xf32>
    %c0_38 = arith.constant 0 : index
    %c112 = arith.constant 112 : index
    %25 = vector.load %arg4[%c0_38, %c112] : memref<16x192xf32, #tpu.memory_space<vmem>>, vector<16x16xf32>
    tpu.vector_store %arg4[%c0_38, %c112], %24 {strides = array<i32>} : memref<16x192xf32, #tpu.memory_space<vmem>>, vector<16x16xf32>,
    %cst_39 = arith.constant 0.000000e+00 : f32
    %26 = vector.broadcast %cst_39 : f32 to vector<1x64xf32>
    %c15 = arith.constant 15 : index
    %c128 = arith.constant 128 : index
    %27 = vector.load %arg4[%c15, %c128] : memref<16x192xf32, #tpu.memory_space<vmem>>, vector<1x64xf32>
    tpu.vector_store %arg4[%c15, %c128], %26 {strides = array<i32>} : memref<16x192xf32, #tpu.memory_space<vmem>>, vector<1x64xf32>,
    %c0_40 = arith.constant 0 : index
    %c0_41 = arith.constant 0 : index
    %c1_42 = arith.constant 1 : index
    %c0_43 = arith.constant 0 : index
    %28 = vector.load %arg1[%c0_40, %c0_41, %c1_42, %c0_43] : memref<1x4x16x16xf32, #tpu.memory_space<vmem>>, vector<1x1x15x16xf32>
    %29 = vector.shape_cast %28 : vector<1x1x15x16xf32> to vector<15x16xf32>
    %c0_44 = arith.constant 0 : index
    %c128_45 = arith.constant 128 : index
    %30 = vector.load %arg4[%c0_44, %c128_45] : memref<16x192xf32, #tpu.memory_space<vmem>>, vector<15x16xf32>
    tpu.vector_store %arg4[%c0_44, %c128_45], %29 {strides = array<i32>} : memref<16x192xf32, #tpu.memory_space<vmem>>, vector<15x16xf32>,
    %c0_46 = arith.constant 0 : index
    %c1_47 = arith.constant 1 : index
    %c1_48 = arith.constant 1 : index
    %c0_49 = arith.constant 0 : index
    %31 = vector.load %arg1[%c0_46, %c1_47, %c1_48, %c0_49] : memref<1x4x16x16xf32, #tpu.memory_space<vmem>>, vector<1x1x15x16xf32>
    %32 = vector.shape_cast %31 : vector<1x1x15x16xf32> to vector<15x16xf32>
    %c0_50 = arith.constant 0 : index
    %c144 = arith.constant 144 : index
    %33 = vector.load %arg4[%c0_50, %c144] : memref<16x192xf32, #tpu.memory_space<vmem>>, vector<15x16xf32>
    tpu.vector_store %arg4[%c0_50, %c144], %32 {strides = array<i32>} : memref<16x192xf32, #tpu.memory_space<vmem>>, vector<15x16xf32>,
    %c0_51 = arith.constant 0 : index
    %c2_52 = arith.constant 2 : index
    %c1_53 = arith.constant 1 : index
    %c0_54 = arith.constant 0 : index
    %34 = vector.load %arg1[%c0_51, %c2_52, %c1_53, %c0_54] : memref<1x4x16x16xf32, #tpu.memory_space<vmem>>, vector<1x1x15x16xf32>
    %35 = vector.shape_cast %34 : vector<1x1x15x16xf32> to vector<15x16xf32>
    %c0_55 = arith.constant 0 : index
    %c160 = arith.constant 160 : index
    %36 = vector.load %arg4[%c0_55, %c160] : memref<16x192xf32, #tpu.memory_space<vmem>>, vector<15x16xf32>
    tpu.vector_store %arg4[%c0_55, %c160], %35 {strides = array<i32>} : memref<16x192xf32, #tpu.memory_space<vmem>>, vector<15x16xf32>,
    %c0_56 = arith.constant 0 : index
    %c3_57 = arith.constant 3 : index
    %c1_58 = arith.constant 1 : index
    %c0_59 = arith.constant 0 : index
    %37 = vector.load %arg1[%c0_56, %c3_57, %c1_58, %c0_59] : memref<1x4x16x16xf32, #tpu.memory_space<vmem>>, vector<1x1x15x16xf32>
    %38 = vector.shape_cast %37 : vector<1x1x15x16xf32> to vector<15x16xf32>
    %c0_60 = arith.constant 0 : index
    %c176 = arith.constant 176 : index
    %39 = vector.load %arg4[%c0_60, %c176] : memref<16x192xf32, #tpu.memory_space<vmem>>, vector<15x16xf32>
    tpu.vector_store %arg4[%c0_60, %c176], %38 {strides = array<i32>} : memref<16x192xf32, #tpu.memory_space<vmem>>, vector<15x16xf32>,
    %c0_61 = arith.constant 0 : index
    %c0_62 = arith.constant 0 : index
    %40 = vector.load %arg4[%c0_61, %c0_62] : memref<16x192xf32, #tpu.memory_space<vmem>>, vector<16x192xf32>
    %c0_63 = arith.constant 0 : index
    %c0_64 = arith.constant 0 : index
    %41 = vector.load %arg2[%c0_63, %c0_64] : memref<192x128xf32, #tpu.memory_space<vmem>>, vector<192x128xf32>
    %cst_65 = arith.constant dense<0.000000e+00> : vector<16x128xf32>
    %42 = tpu.matmul %40, %41, %cst_65 {dimension_numbers = #tpu.dot_dimension_numbers<[1], [0], [0], [1], [0, 0, 1, 1], [], []>} : vector<16x192xf32>, vector<192x128xf32>, vector<16x128xf32> -> vector<16x128xf32>
    %cst_66 = arith.constant 0.000000e+00 : f32
    %43 = vector.broadcast %cst_66 : f32 to vector<16x128xf32>
    %44 = arith.maximumf %42, %43 : vector<16x128xf32>
    %c0_67 = arith.constant 0 : index
    %c0_68 = arith.constant 0 : index
    %c0_69 = arith.constant 0 : index
    %45 = vector.load %arg3[%c0_67, %c0_68, %c0_69] : memref<1x16x128xf32, #tpu.memory_space<vmem>>, vector<1x16x128xf32>
    %46 = vector.shape_cast %45 : vector<1x16x128xf32> to vector<16x128xf32>
    %47 = vector.shape_cast %44 : vector<16x128xf32> to vector<1x16x128xf32>
    tpu.vector_store %arg3[%c0_67, %c0_68, %c0_69], %47 {strides = array<i32>} : memref<1x16x128xf32, #tpu.memory_space<vmem>>, vector<1x16x128xf32>,
    return
  }
  func.func @transform_0(%arg0: i32) -> (i32, i32, i32, i32) {
    %c0_i32 = arith.constant 0 : i32
    %c0_i32_0 = arith.constant 0 : i32
    %c0_i32_1 = arith.constant 0 : i32
    %c0_i32_2 = arith.constant 0 : i32
    return %arg0, %c0_i32, %c0_i32_0, %c0_i32_1 : i32, i32, i32, i32
  }
  func.func @transform_1(%arg0: i32) -> (i32, i32) {
    %c0_i32 = arith.constant 0 : i32
    %c0_i32_0 = arith.constant 0 : i32
    %c0_i32_1 = arith.constant 0 : i32
    return %c0_i32, %c0_i32_0 : i32, i32
  }
  func.func @transform_2(%arg0: i32) -> (i32, i32, i32) {
    %c0_i32 = arith.constant 0 : i32
    %c0_i32_0 = arith.constant 0 : i32
    %c0_i32_1 = arith.constant 0 : i32
    return %arg0, %c0_i32, %c0_i32_0 : i32, i32, i32
  }
}

</mosaic_0001>

<llo_original>
// kernel: _conv_relu_forward.1
$region0: #{_conv_relu_forward.1}
  #allocation0 [shape = 'u32[]', space=smem, size = 0x4, offset = 0x4, fixed_abs, tag = 'smem constant byte address 0x4 - core index']
  #allocation1 [shape = 'u32[144,128]{1,0:T(1,128)}', space=vmem, size = 0x12000, scoped, tag = 'internal scratch']
  #allocation2 [shape = 'f32[16,192]{1,0:T(8,128)}', space=vmem, size = 0x4000, scoped, tag = 'scratch operand']
  %s0 = inlined_call_operand.hbm [shape: f32[2,4,16,16], index: 0, kind: input, shape index: {}]
  %s1 = inlined_call_operand.hbm [shape: f32[192,128], index: 1, kind: input, shape index: {}]
  %s2 = inlined_call_operand.vmem [shape: f32[2,16,128], index: 2, kind: output, shape index: {}]
  %s3 = sld [smem:[#allocation0]]
  $region49: #{_conv_relu_forward.1} parent=0
    _
  %s5 = ssub.s32 1, %s3
  %s6 = scalar_select 0, %s5, %s3
  $region1: #{_conv_relu_forward.1} parent=0
    #allocation3 [shape = 'u8[65536]{0}', space=vmem, size = 0x10000, scoped, tag = 'input window, operand 0']
    #allocation4 [shape = 's32[2]{0}', space=sflag, size = 0x8, scoped, tag = 'scoped memory for _conv_relu_forward.1']
    #allocation5 [shape = 'u8[98304]{0}', space=vmem, size = 0x18000, scoped, tag = 'input window, operand 1, single buffered']
    #allocation6 [shape = 's32[1]{0}', space=sflag, size = 0x4, scoped, tag = 'scoped memory for _conv_relu_forward.1']
    %7 = vsyncpa [#allocation4], 0
    %s8 = scalar_lea.sflag [#allocation4], 1
    %9 = vsyncpa %s8, 0
    %10 = vsyncpa [#allocation6], 0
    loop: start=0, step=1, limit=4
    $region2: #{_conv_relu_forward.1} parent=1 // loop_pre_header
      _
    $region3: #{_conv_relu_forward.1} parent=1 // loop_header
      %s12 = sphi 0, %s16
      %p13 = scmp.ge.s32.totalorder %s12, 4
      %s22 = sphi 0, %s24
      %s25 = sphi 0, %s22
      %s26 = sphi 0, %s25
      %s42 = sphi 0, %s26
      %s46 = sphi 0, %s46
      %s48 = sphi 0, %s46
      %s49 = sphi 0, %s48
      %s63 = sphi 0, %s49
      %s69 = sphi 0, %s71
      %s72 = sphi 0, %s69
      %s73 = sphi 0, %s72
      %s89 = sphi 0, %s73
    $region4: #{_conv_relu_forward.1} parent=1 // loop_header_branch
      %15 = sbr.rel (%p13) target = $region8
    $region5: #{_conv_relu_forward.1} parent=1 // loop_body
      %s17 = ssub.s32 %s12, 1
      %s18 = ssub.s32 %s12, 2
      %s19 = sadd.s32 %s12, 1
      %s20 = ssub.s32 %s12, %s19
      %p21 = scmp.eq.s32.totalorder %s20, 0
      %s23 = sadd.s32 %s22, 1
      %s24 = scalar_select %p21, %s22, %s23
      %p27 = pneg %p21
      %p28 = scmp.eq.s32.totalorder %s12, 1
      %p29 = por %p27, %p28
      %p30 = scmp.ne.s32.totalorder %s22, %s25
      %p31 = scmp.eq.s32.totalorder %s12, 0
      %p32 = por %p30, %p31
      %p33 = scmp.ne.s32.totalorder %s22, %s25
      %p34 = scmp.eq.s32.totalorder %s17, 1
      %p35 = por %p33, %p34
      %p36 = scmp.ne.s32.totalorder %s25, %s26
      %p37 = scmp.eq.s32.totalorder %s17, 0
      %p38 = por %p36, %p37
      %p39 = scmp.ne.s32.totalorder %s25, %s26
      %p40 = scmp.eq.s32.totalorder %s18, 1
      %p41 = por %p39, %p40
      %p43 = scmp.ne.s32.totalorder %s26, %s42
      %p44 = scmp.eq.s32.totalorder %s18, 0
      %p45 = por %p43, %p44
      %s47 = sadd.s32 %s46, 1
      %p50 = scmp.eq.s32.totalorder %s12, 1
      %p51 = scmp.ne.s32.totalorder %s46, %s48
      %p52 = scmp.eq.s32.totalorder %s12, 0
      %p53 = por %p51, %p52
      %p54 = scmp.ne.s32.totalorder %s46, %s48
      %p55 = scmp.eq.s32.totalorder %s17, 1
      %p56 = por %p54, %p55
      %p57 = scmp.ne.s32.totalorder %s48, %s49
      %p58 = scmp.eq.s32.totalorder %s17, 0
      %p59 = por %p57, %p58
      %p60 = scmp.ne.s32.totalorder %s48, %s49
      %p61 = scmp.eq.s32.totalorder %s18, 1
      %p62 = por %p60, %p61
      %p64 = scmp.ne.s32.totalorder %s49, %s63
      %p65 = scmp.eq.s32.totalorder %s18, 0
      %p66 = por %p64, %p65
      %s67 = ssub.s32 %s12, %s19
      %p68 = scmp.eq.s32.totalorder %s67, 0
      %s70 = sadd.s32 %s69, 1
      %s71 = scalar_select %p68, %s69, %s70
      %p74 = pneg %p68
      %p75 = scmp.eq.s32.totalorder %s12, 1
      %p76 = por %p74, %p75
      %p77 = scmp.ne.s32.totalorder %s69, %s72
      %p78 = scmp.eq.s32.totalorder %s12, 0
      %p79 = por %p77, %p78
      %p80 = scmp.ne.s32.totalorder %s69, %s72
      %p81 = scmp.eq.s32.totalorder %s17, 1
      %p82 = por %p80, %p81
      %p83 = scmp.ne.s32.totalorder %s72, %s73
      %p84 = scmp.eq.s32.totalorder %s17, 0
      %p85 = por %p83, %p84
      %p86 = scmp.ne.s32.totalorder %s72, %s73
      %p87 = scmp.eq.s32.totalorder %s18, 1
      %p88 = por %p86, %p87
      %p90 = scmp.ne.s32.totalorder %s73, %s89
      %p91 = scmp.eq.s32.totalorder %s18, 0
      %p92 = por %p90, %p91
      %p93 = scmp.le.s32.totalorder 1, %s12
      %p94 = scmp.lt.s32.totalorder %s12, 3
      %p95 = pnand %p93, %p94
      %p96 = pneg %p95
      // Predicated region
      $region9: #{_conv_relu_forward.1} parent=5 // pred_check
        _
      $region10: #{_conv_relu_forward.1} parent=5 // pred_check_branch
        %98 = sbr.rel (%p95) target = $region12
      $region11: #{_conv_relu_forward.1} parent=5 // pred_region
        %s99 = ssub.s32 %s12, 1
        // Predicated region
        $region13: #{_conv_relu_forward.1} parent=11 // pred_check
          %p100 = pneg %p59
        $region14: #{_conv_relu_forward.1} parent=11 // pred_check_branch
          %102 = sbr.rel (%p100) target = $region16
        $region15: #{_conv_relu_forward.1} parent=11 // pred_region
          %s104 = ssub.s32 3072, 3072
          %105 = vsyncadd [#allocation6], %s104
          %s106 = sshll.u32 [#allocation5], 4
          %s107 = int_to_ptr.vmem [resolvable:$true] %s106
          %112 = dma.hbm_to_vmem [thread:$0]  %s1, 3072, %s107, [#allocation6], 128, 128, 8
        $region16: #{_conv_relu_forward.1} parent=11 // pred_fallthru
          _
      $region12: #{_conv_relu_forward.1} parent=5 // pred_fallthru
        _
      %p113 = scmp.lt.s32.totalorder %s12, 2
      // Predicated region
      $region17: #{_conv_relu_forward.1} parent=5 // pred_check
        %p114 = pneg %p113
      $region18: #{_conv_relu_forward.1} parent=5 // pred_check_branch
        %116 = sbr.rel (%p114) target = $region20
      $region19: #{_conv_relu_forward.1} parent=5 // pred_region
        // Predicated region
        $region21: #{_conv_relu_forward.1} parent=19 // pred_check
          %p117 = pneg %p32
        $region22: #{_conv_relu_forward.1} parent=19 // pred_check_branch
          %119 = sbr.rel (%p117) target = $region24
        $region23: #{_conv_relu_forward.1} parent=19 // pred_region
          %s120 = sand.u32 %s22, 1
          %s121 = scalar_lea.sflag [#allocation4], %s120
          %s122 = sand.u32 %s22, 1
          %s123 = smul.addr %s122, 64
          %s124 = scalar_lea.vmem [#allocation3], %s123
          %s126 = ssub.s32 1024, 1024
          %127 = vsyncadd %s121, %s126
          %s128 = smul.addr %s12, 8
          %s129 = smul.addr %s128, 128
          %s130 = scalar_lea.hbm %s0, %s129
          %s131 = sshll.u32 %s124, 4
          %s132 = int_to_ptr.vmem [resolvable:$true] %s131
          %137 = dma.hbm_to_vmem [thread:$0]  %s130, 1024, %s132, %s121, 128, 128, 8
        $region24: #{_conv_relu_forward.1} parent=19 // pred_fallthru
          _
      $region20: #{_conv_relu_forward.1} parent=5 // pred_fallthru
        _
      %p138 = scmp.le.s32.totalorder 1, %s12
      %p139 = scmp.lt.s32.totalorder %s12, 3
      %p140 = pnand %p138, %p139
      %p141 = pneg %p140
      // Predicated region
      $region25: #{_conv_relu_forward.1} parent=5 // pred_check
        _
      $region26: #{_conv_relu_forward.1} parent=5 // pred_check_branch
        %143 = sbr.rel (%p140) target = $region28
      $region27: #{_conv_relu_forward.1} parent=5 // pred_region
        %s144 = ssub.s32 %s12, 1
        %s145 = sand.u32 %s25, 1
        %s146 = scalar_lea.sflag [#allocation4], %s145
        %s147 = sand.u32 %s25, 1
        %s148 = smul.addr %s147, 64
        %s149 = scalar_lea.vmem [#allocation3], %s148
        // Predicated region
        $region29: #{_conv_relu_forward.1} parent=27 // pred_check
          %p150 = pneg %p38
        $region30: #{_conv_relu_forward.1} parent=27 // pred_check_branch
          %152 = sbr.rel (%p150) target = $region32
        $region31: #{_conv_relu_forward.1} parent=27 // pred_region
          %153 = dma.done %s146, 1024
        $region32: #{_conv_relu_forward.1} parent=27 // pred_fallthru
          _
        // Predicated region
        $region33: #{_conv_relu_forward.1} parent=27 // pred_check
          %p154 = pneg %p59
        $region34: #{_conv_relu_forward.1} parent=27 // pred_check_branch
          %156 = sbr.rel (%p154) target = $region36
        $region35: #{_conv_relu_forward.1} parent=27 // pred_region
          %157 = dma.done [#allocation6], 3072
        $region36: #{_conv_relu_forward.1} parent=27 // pred_fallthru
          _
        %s158 = sand.u32 %s25, 1
        %s159 = scalar_lea.sflag [#allocation4], %s158
        %s160 = sand.u32 %s25, 1
        %s161 = smul.addr %s160, 64
        %s162 = scalar_lea.vmem [#allocation3], %s161
        %p163 = pneg %p38
        %p164 = pneg %p35
        %p165 = pneg %p59
        %p166 = pneg %p56
        %p167 = pneg %p85
        %p168 = pneg %p82
        %p169 = scmp.lt.s32.totalorder %s17, 1
        %s170 = scalar_select %p169, %s17, 1
        %s171 = smul.addr %s170, 2
        %s172 = smul.addr %s171, 8
        %s173 = scalar_lea.vmem %s2, %s172
        %p174 = scmp.lt.s32.totalorder %s17, 1
        %s175 = scalar_select %p174, %s17, 1
        %s176 = smul.addr %s175, 2
        %s177 = smul.addr %s176, 8
        %s178 = scalar_lea.vmem %s2, %s177
        %vm179 = vcmask 516096
        %180 = vst.msk [vmem:[#allocation2] sm:$0x1] %vm179, 0.0
        %v181 = vld [vmem:[%s149] sm:$0xff]
        %v182 = vld [vmem:[%s149 + $0x8] sm:$0x7f]
        %vm185 = vcmask 1040384
        %v186 = vrot.slane %v181, 7
        %v187 = vrot.slane %v182, 7
        %v188 = vsel %vm185, %v186, %v187
        %vm191 = vcmask 130049
        %192 = vst.msk [vmem:[#allocation2] sm:$0xfe] %vm191, %v186
        %vm193 = vcmask 130048
        %194 = vst.msk [vmem:[#allocation2 + $0x10] sm:$0xff] %vm193, %v188
        %s195 = scalar_lea.vmem %s149, 16 [#allocation3]
        %v196 = vld [vmem:[%s195] sm:$0xff]
        %v197 = vld [vmem:[%s195 + $0x8] sm:$0x7f]
        %v200 = vrot.slane %v196, 7
        %v201 = vrot.slane %v197, 7
        %v202 = vsel %vm185, %v200, %v201
        %203 = vrot.lane.b32.xlu0 %v200, 16
        %v204 = vpop.permute.xlu0 %203
        %205 = vrot.lane.b32.xlu0 %v202, 16
        %v206 = vpop.permute.xlu0 %205
        %vm209 = vcmask 261249
        %210 = vst.msk [vmem:[#allocation2] sm:$0xfe] %vm209, %v204
        %vm211 = vcmask 261248
        %212 = vst.msk [vmem:[#allocation2 + $0x10] sm:$0xff] %vm211, %v206
        %s213 = scalar_lea.vmem %s149, 32 [#allocation3]
        %v214 = vld [vmem:[%s213] sm:$0xff]
        %v215 = vld [vmem:[%s213 + $0x8] sm:$0x7f]
        %v218 = vrot.slane %v214, 7
        %v219 = vrot.slane %v215, 7
        %v220 = vsel %vm185, %v218, %v219
        %221 = vrot.lane.b32.xlu0 %v218, 32
        %v222 = vpop.permute.xlu0 %221
        %223 = vrot.lane.b32.xlu0 %v220, 32
        %v224 = vpop.permute.xlu0 %223
        %vm227 = vcmask 392449
        %228 = vst.msk [vmem:[#allocation2] sm:$0xfe] %vm227, %v222
        %vm229 = vcmask 392448
        %230 = vst.msk [vmem:[#allocation2 + $0x10] sm:$0xff] %vm229, %v224
        %s231 = scalar_lea.vmem %s149, 48 [#allocation3]
        %v232 = vld [vmem:[%s231] sm:$0xff]
        %v233 = vld [vmem:[%s231 + $0x8] sm:$0x7f]
        %v236 = vrot.slane %v232, 7
        %v237 = vrot.slane %v233, 7
        %v238 = vsel %vm185, %v236, %v237
        %239 = vrot.lane.b32.xlu0 %v236, 48
        %v240 = vpop.permute.xlu0 %239
        %241 = vrot.lane.b32.xlu0 %v238, 48
        %v242 = vpop.permute.xlu0 %241
        %vm245 = vcmask 523649
        %246 = vst.msk [vmem:[#allocation2] sm:$0xfe] %vm245, %v240
        %vm247 = vcmask 523648
        %248 = vst.msk [vmem:[#allocation2 + $0x10] sm:$0xff] %vm247, %v242
        %v249 = vld [vmem:[%s149] sm:$0xff]
        %v250 = vld [vmem:[%s149 + $0x8] sm:$0xff]
        %253 = vrot.lane.b32.xlu0 %v249, 64
        %v254 = vpop.permute.xlu0 %253
        %255 = vrot.lane.b32.xlu0 %v250, 64
        %v256 = vpop.permute.xlu0 %255
        %vm259 = vcmask 654848
        %260 = vst.msk [vmem:[#allocation2] sm:$0xff] %vm259, %v254
        %261 = vst.msk [vmem:[#allocation2 + $0x10] sm:$0xff] %vm259, %v256
        %v262 = vld [vmem:[%s195] sm:$0xff]
        %v263 = vld [vmem:[%s195 + $0x8] sm:$0xff]
        %266 = vrot.lane.b32.xlu0 %v262, 80
        %v267 = vpop.permute.xlu0 %266
        %268 = vrot.lane.b32.xlu0 %v263, 80
        %v269 = vpop.permute.xlu0 %268
        %vm272 = vcmask 786048
        %273 = vst.msk [vmem:[#allocation2] sm:$0xff] %vm272, %v267
        %274 = vst.msk [vmem:[#allocation2 + $0x10] sm:$0xff] %vm272, %v269
        %v275 = vld [vmem:[%s213] sm:$0xff]
        %v276 = vld [vmem:[%s213 + $0x8] sm:$0xff]
        %279 = vrot.lane.b32.xlu0 %v275, 96
        %v280 = vpop.permute.xlu0 %279
        %281 = vrot.lane.b32.xlu0 %v276, 96
        %v282 = vpop.permute.xlu0 %281
        %vm285 = vcmask 917248
        %286 = vst.msk [vmem:[#allocation2] sm:$0xff] %vm285, %v280
        %287 = vst.msk [vmem:[#allocation2 + $0x10] sm:$0xff] %vm285, %v282
        %v288 = vld [vmem:[%s231] sm:$0xff]
        %v289 = vld [vmem:[%s231 + $0x8] sm:$0xff]
        %292 = vrot.lane.b32.xlu0 %v288, 112
        %v293 = vpop.permute.xlu0 %292
        %294 = vrot.lane.b32.xlu0 %v289, 112
        %v295 = vpop.permute.xlu0 %294
        %vm298 = vcmask 1048448
        %299 = vst.msk [vmem:[#allocation2] sm:$0xff] %vm298, %v293
        %300 = vst.msk [vmem:[#allocation2 + $0x10] sm:$0xff] %vm298, %v295
        %301 = vst.msk [vmem:[#allocation2 + $0x1f] sm:$0x1] %vm179, 0.0
        %v302 = vld [vmem:[%s149 + $0x1] sm:$0xff]
        %v303 = vld [vmem:[%s149 + $0x9] sm:$0x7f]
        %304 = vst.msk [vmem:[#allocation2 + $0x8] sm:$0xff] %vm193, %v302
        %vm305 = vcmask 129024
        %306 = vst.msk [vmem:[#allocation2 + $0x18] sm:$0x7f] %vm305, %v303
        %v307 = vld [vmem:[%s195 + $0x1] sm:$0xff]
        %v308 = vld [vmem:[%s195 + $0x9] sm:$0x7f]
        %311 = vrot.lane.b32.xlu0 %v307, 16
        %v312 = vpop.permute.xlu0 %311
        %313 = vrot.lane.b32.xlu0 %v308, 16
        %v314 = vpop.permute.xlu0 %313
        %317 = vst.msk [vmem:[#allocation2 + $0x8] sm:$0xff] %vm211, %v312
        %vm318 = vcmask 260224
        %319 = vst.msk [vmem:[#allocation2 + $0x18] sm:$0x7f] %vm318, %v314
        %v320 = vld [vmem:[%s213 + $0x1] sm:$0xff]
        %v321 = vld [vmem:[%s213 + $0x9] sm:$0x7f]
        %324 = vrot.lane.b32.xlu0 %v320, 32
        %v325 = vpop.permute.xlu0 %324
        %326 = vrot.lane.b32.xlu0 %v321, 32
        %v327 = vpop.permute.xlu0 %326
        %330 = vst.msk [vmem:[#allocation2 + $0x8] sm:$0xff] %vm229, %v325
        %vm331 = vcmask 391424
        %332 = vst.msk [vmem:[#allocation2 + $0x18] sm:$0x7f] %vm331, %v327
        %v333 = vld [vmem:[%s231 + $0x1] sm:$0xff]
        %v334 = vld [vmem:[%s231 + $0x9] sm:$0x7f]
        %337 = vrot.lane.b32.xlu0 %v333, 48
        %v338 = vpop.permute.xlu0 %337
        %339 = vrot.lane.b32.xlu0 %v334, 48
        %v340 = vpop.permute.xlu0 %339
        %343 = vst.msk [vmem:[#allocation2 + $0x8] sm:$0xff] %vm247, %v338
        %vm344 = vcmask 522624
        %345 = vst.msk [vmem:[#allocation2 + $0x18] sm:$0x7f] %vm344, %v340
        %v346 = vld [vmem:[#allocation2] sm:$0xff]
        %v347 = vld [vmem:[#allocation2 + $0x8] sm:$0xff]
        %v348 = vld [vmem:[#allocation2 + $0x10] sm:$0xff]
        %v349 = vld [vmem:[#allocation2 + $0x18] sm:$0xff]
        %v350 = vld [vmem:[#allocation5] sm:$0xff]
        %v351 = vld [vmem:[#allocation5 + $0x8] sm:$0xff]
        %v352 = vld [vmem:[#allocation5 + $0x10] sm:$0xff]
        %v353 = vld [vmem:[#allocation5 + $0x18] sm:$0xff]
        %v354 = vld [vmem:[#allocation5 + $0x20] sm:$0xff]
        %v355 = vld [vmem:[#allocation5 + $0x28] sm:$0xff]
        %v356 = vld [vmem:[#allocation5 + $0x30] sm:$0xff]
        %v357 = vld [vmem:[#allocation5 + $0x38] sm:$0xff]
        %v358 = vld [vmem:[#allocation5 + $0x40] sm:$0xff]
        %v359 = vld [vmem:[#allocation5 + $0x48] sm:$0xff]
        %v360 = vld [vmem:[#allocation5 + $0x50] sm:$0xff]
        %v361 = vld [vmem:[#allocation5 + $0x58] sm:$0xff]
        %v362 = vld [vmem:[#allocation5 + $0x60] sm:$0xff]
        %v363 = vld [vmem:[#allocation5 + $0x68] sm:$0xff]
        %v364 = vld [vmem:[#allocation5 + $0x70] sm:$0xff]
        %v365 = vld [vmem:[#allocation5 + $0x78] sm:$0xff]
        %v366 = vld [vmem:[#allocation5 + $0x80] sm:$0xff]
        %v367 = vld [vmem:[#allocation5 + $0x88] sm:$0xff]
        %v368 = vld [vmem:[#allocation5 + $0x90] sm:$0xff]
        %v369 = vld [vmem:[#allocation5 + $0x98] sm:$0xff]
        %v370 = vld [vmem:[#allocation5 + $0xa0] sm:$0xff]
        %v371 = vld [vmem:[#allocation5 + $0xa8] sm:$0xff]
        %v372 = vld [vmem:[#allocation5 + $0xb0] sm:$0xff]
        %v373 = vld [vmem:[#allocation5 + $0xb8] sm:$0xff]
        %vm374 = vcmask 523264
        %v376 = vsel %vm374, %v347, 0
        %v379 = vsel %vm374, %v349, 0
        %381 = vmatprep.subr.mxu0 0.0
        %382 = vmatpush1.msra.mxu0 %v350
        %383 = vmatprep.subr.mxu0 0.0
        %384 = vmatpush1.msra.mxu0 %v351
        %385 = vmatprep.subr.mxu0 0.0
        %386 = vmatpush1.msra.mxu0 %v352
        %387 = vmatprep.subr.mxu0 0.0
        %388 = vmatpush1.msra.mxu0 %v353
        %389 = vmatprep.subr.mxu0 0.0
        %390 = vmatpush1.msra.mxu0 %v354
        %391 = vmatprep.subr.mxu0 0.0
        %392 = vmatpush1.msra.mxu0 %v355
        %393 = vmatprep.subr.mxu0 0.0
        %394 = vmatpush1.msra.mxu0 %v356
        %395 = vmatprep.subr.mxu0 0.0
        %396 = vmatpush1.msra.mxu0 %v357
        %397 = vmatprep.subr.mxu0 0.0
        %398 = vmatpush1.msra.mxu0 %v358
        %399 = vmatprep.subr.mxu0 0.0
        %400 = vmatpush1.msra.mxu0 %v359
        %401 = vmatprep.subr.mxu0 0.0
        %402 = vmatpush1.msra.mxu0 %v360
        %403 = vmatprep.subr.mxu0 0.0
        %404 = vmatpush1.msra.mxu0 %v361
        %405 = vmatprep.subr.mxu0 0.0
        %406 = vmatpush1.msra.mxu0 %v362
        %407 = vmatprep.subr.mxu0 0.0
        %408 = vmatpush1.msra.mxu0 %v363
        %409 = vmatprep.subr.mxu0 0.0
        %410 = vmatpush1.msra.mxu0 %v364
        %411 = vmatprep.subr.mxu0 0.0
        %412 = vmatpush1.msra.mxu0 %v365
        %413 = vmatprep.subr.mxu0 0.0
        %414 = vmatpush1.msra.mxu0 %v366
        %415 = vmatprep.subr.mxu0 0.0
        %416 = vmatpush1.msra.mxu0 %v367
        %417 = vmatprep.subr.mxu0 0.0
        %418 = vmatpush1.msra.mxu0 %v368
        %419 = vmatprep.subr.mxu0 0.0
        %420 = vmatpush1.msra.mxu0 %v369
        %421 = vmatprep.subr.mxu0 0.0
        %422 = vmatpush1.msra.mxu0 %v370
        %423 = vmatprep.subr.mxu0 0.0
        %424 = vmatpush1.msra.mxu0 %v371
        %425 = vmatprep.subr.mxu0 0.0
        %426 = vmatpush1.msra.mxu0 %v372
        %427 = vmatprep.subr.mxu0 0.0
        %428 = vmatpush1.msra.mxu0 %v373
        %429 = vmatprep.subr.mxu0 0.0
        %430 = vmatpush1.msra.mxu0 0.0
        %431 = vmatprep.subr.mxu0 0.0
        %432 = vmatpush1.msra.mxu0 0.0
        %433 = vmatprep.subr.mxu0 0.0
        %434 = vmatpush1.msra.mxu0 0.0
        %435 = vmatprep.subr.mxu0 0.0
        %436 = vmatpush1.msra.mxu0 0.0
        %437 = vmatprep.subr.mxu0 0.0
        %438 = vmatpush1.msra.mxu0 0.0
        %439 = vmatprep.subr.mxu0 0.0
        %440 = vmatpush1.msra.mxu0 0.0
        %441 = vmatprep.subr.mxu0 0.0
        %442 = vmatpush1.msra.mxu0 0.0
        %443 = vmatprep.subr.mxu0 0.0
        %444 = vmatpush1.msra.mxu0 0.0
        %445 = vmatprep.mubr.f32.mxu0 %v376
        %446 = vmatmul.mubr.f32.gmra.mrb[0].mxu0 %v346
        %v447 = vpop.f32.mrb[0].mxu0
        %v448 = vadd.f32 0.0, %v447
        %v449 = vpop.f32.mrb[0].mxu0
        %450 = vmatprep.mubr.f32.mxu0 %v379
        %451 = vmatmul.mubr.f32.gmra.mrb[0].mxu0 %v348
        %v452 = vpop.f32.mrb[0].mxu0
        %v453 = vadd.f32 0.0, %v452
        %v454 = vpop.f32.mrb[0].mxu0
        %455 = vdwg.mxu0
        %v456 = vmax.f32 %v448, 0.0
        %v457 = vmax.f32 %v453, 0.0
        %458 = vst [vmem:[%s178] sm:$0xff] %v456
        %459 = vst [vmem:[%s178 + $0x8] sm:$0xff] %v457
        %p460 = scmp.lt.s32.totalorder %s17, 1
        %s461 = scalar_select %p460, %s17, 1
        %s462 = smul.addr %s461, 2
        %s463 = smul.addr %s462, 8
        %s464 = scalar_lea.vmem %s2, %s463
        // Predicated region
        $region37: #{_conv_relu_forward.1} parent=27 // pred_check
          %p465 = pneg %p82
        $region38: #{_conv_relu_forward.1} parent=27 // pred_check_branch
          %467 = sbr.rel (%p465) target = $region40
        $region39: #{_conv_relu_forward.1} parent=27 // pred_region
          _
        $region40: #{_conv_relu_forward.1} parent=27 // pred_fallthru
          _
      $region28: #{_conv_relu_forward.1} parent=5 // pred_fallthru
        _
      %p468 = scmp.le.s32.totalorder 2, %s12
      // Predicated region
      $region41: #{_conv_relu_forward.1} parent=5 // pred_check
        %p469 = pneg %p468
      $region42: #{_conv_relu_forward.1} parent=5 // pred_check_branch
        %471 = sbr.rel (%p469) target = $region44
      $region43: #{_conv_relu_forward.1} parent=5 // pred_region
        %s472 = ssub.s32 %s12, 2
        // Predicated region
        $region45: #{_conv_relu_forward.1} parent=43 // pred_check
          %p473 = pneg %p88
        $region46: #{_conv_relu_forward.1} parent=43 // pred_check_branch
          %475 = sbr.rel (%p473) target = $region48
        $region47: #{_conv_relu_forward.1} parent=43 // pred_region
          %p476 = scmp.lt.s32.totalorder %s18, 1
          %s477 = scalar_select %p476, %s18, 1
          %s478 = smul.addr %s477, 2
          %s479 = smul.addr %s478, 8
          %s480 = scalar_lea.vmem %s2, %s479
        $region48: #{_conv_relu_forward.1} parent=43 // pred_fallthru
          _
      $region44: #{_conv_relu_forward.1} parent=5 // pred_fallthru
        _
    $region6: #{_conv_relu_forward.1} parent=1 // loop_footer
      %s16 = sadd.s32 1, %s12
    $region7: #{_conv_relu_forward.1} parent=1 // loop_footer_branch
      %11 = sbr.rel target = $region3
    $region8: #{_conv_relu_forward.1} parent=1 // loop_exit
      _
    %481 = vsyncpa [#allocation4], 1
    %s482 = scalar_lea.sflag [#allocation4], 1
    %483 = vsyncpa %s482, 1
    %484 = vsyncpa [#allocation6], 1

</llo_original>
